<compile_context>
chip_gen: v5e
topology: v5e:2x2
jax: 0.10.0
libtpu: 0.0.40
codegen_flags: <defaults>
</compile_context>

<pallas_src>
import functools
import math

import jax
import jax.numpy as jnp
from jax.experimental import pallas as pl
from jax.experimental.pallas import tpu as pltpu


def _pe_kernel(inv_freq_ref, odd_ref, o_ref, *, reps):
    # o_ref block: (T_TILE, LANE_PAD) float32; inv_freq/odd: (1, rep).
    t_tile = o_ref.shape[0]
    t_start = pl.program_id(0) * t_tile  # absolute time offset of this tile

    # Positions for this tile: (T_TILE, 1).
    pos = jax.lax.broadcasted_iota(jnp.int32, (t_tile, 1), 0) + t_start
    pos = pos.astype(jnp.float32)

    # (T_TILE, rep) argument; exact sin for even feature dims, cos for odd.
    arg = pos * inv_freq_ref[...]
    table = jnp.where(odd_ref[...] > 0.5, jnp.cos(arg), jnp.sin(arg))

    # Replicate across the lane axis (value depends only on lane mod D, and
    # rep is a multiple of D), then store lane-dense.
    if reps > 1:
        table = jnp.tile(table, (1, reps))
    o_ref[...] = table.astype(o_ref.dtype)


def _choose_t_tile(T, lane_pad, itemsize=4, block_budget_bytes=8 << 20):
    """Pick t_tile (mult. of 8 or == full T) and padded T so every block stays
    within the budget; prefer >= 2 grid steps so v7x megacore is usable."""
    row_bytes = lane_pad * itemsize
    max_rows = max(8, (block_budget_bytes // row_bytes) // 8 * 8)
    if T <= max_rows:
        if T >= 16 and T % 16 == 0:
            return T // 2, T            # two steps, each a multiple of 8 rows
        return T, T                     # single full-extent block (always legal)
    t_tile = max_rows
    t_pad = pl.cdiv(T, t_tile) * t_tile  # pad; extra rows sliced off afterwards
    return t_tile, t_pad


def sinusoidal_positional_encoding(x, feature_dim, time_window):
    """Equivalent of SinusoidalPositionalEncoding(feature_dim, time_window)(x).

    x: (B, T, N, D) with T <= time_window and D == feature_dim.
    Returns float32 (B, T, N, D) == pe[:, :T, :, :] broadcast to x's shape.
    """
    B, T, N, D = x.shape
    assert D == feature_dim, "feature_dim mismatch"
    assert T <= time_window, "sequence length exceeds time_window"
    assert feature_dim % 2 == 0, "feature_dim must be even (as in the torch module)"

    lane_width = N * D                               # D innermost -> free view back
    lane_pad = ((lane_width + 127) // 128) * 128     # full-width unmasked stores

    # Compute lanes: one lcm(D, 128) stretch when it tiles lane_pad evenly.
    rep = D * 128 // math.gcd(D, 128)
    if lane_pad % rep != 0:
        rep = lane_pad
    reps = lane_pad // rep

    # Host-precomputed per-lane rows (exact integer remainders, done once).
    lane = jnp.arange(rep, dtype=jnp.int32)
    d = lane % D
    even = (d - (d % 2)).astype(jnp.float32)          # 2 * (d // 2)
    inv_freq = jnp.exp(even * (-math.log(10000.0) / D)).reshape(1, rep)
    odd = (d % 2).astype(jnp.float32).reshape(1, rep)

    t_tile, t_pad = _choose_t_tile(T, lane_pad)
    grid = (t_pad // t_tile,)

    out = pl.pallas_call(
        functools.partial(_pe_kernel, reps=reps),
        out_shape=jax.ShapeDtypeStruct((t_pad, lane_pad), jnp.float32),
        grid=grid,
        in_specs=[
            pl.BlockSpec((1, rep), lambda t: (0, 0)),
            pl.BlockSpec((1, rep), lambda t: (0, 0)),
        ],
        out_specs=pl.BlockSpec((t_tile, lane_pad), lambda t: (t, 0)),
        compiler_params=pltpu.CompilerParams(
            dimension_semantics=("parallel",),
            vmem_limit_bytes=32 * 1024 * 1024,
        ),
    )(inv_freq, odd)

    # Drop padding, view back to (T, N, D), and expand over batch (analogue of
    # torch's expand_as view; fuses into downstream consumers under jit).
    pe = out[:T, :lane_width].reshape(T, N, D)
    return jnp.broadcast_to(pe[None, :, :, :], (B, T, N, D))


def _reference_pe(x, feature_dim, time_window):
    """Pure-JAX reference mirroring the torch buffer construction."""
    pe = jnp.zeros((time_window, feature_dim), dtype=jnp.float32)
    position = jnp.arange(0, time_window, dtype=jnp.float32)[:, None]
    div_term = jnp.exp(
        jnp.arange(0, feature_dim, 2, dtype=jnp.float32)
        * (-math.log(10000.0) / feature_dim)
    )
    pe = pe.at[:, 0::2].set(jnp.sin(position * div_term))
    pe = pe.at[:, 1::2].set(jnp.cos(position * div_term))
    pe = pe[None, :, None, :]  # (1, time_window, 1, D)
    B, T, N, D = x.shape
    return jnp.broadcast_to(pe[:, :T, :, :], (B, T, N, D))


if __name__ == "__main__":
    key = jax.random.PRNGKey(0)

    # small shapes consistent with the forward: x (B, T, N, D)
    B, T, N, D = 2, 8, 16, 32
    time_window = 16       # module's buffer length (max T)
    feature_dim = D

    x = jax.random.normal(key, (B, T, N, D), dtype=jnp.float32)

    out = sinusoidal_positional_encoding(x, feature_dim, time_window)
    out = jax.block_until_ready(out)

    ref = _reference_pe(x, feature_dim, time_window)
    assert out.shape == (B, T, N, D)
    assert out.dtype == jnp.float32
    assert jnp.allclose(out, ref, atol=1e-5, rtol=1e-5), float(
        jnp.max(jnp.abs(out - ref))
    )

    print("KERNEL_OK")
</pallas_src>

<mosaic_0001>
module attributes {stable_mosaic.version = 11 : i64} {
  func.func @_pe_kernel(%arg0: i32, %arg1: memref<1x128xf32, #tpu.memory_space<vmem>>, %arg2: memref<1x128xf32, #tpu.memory_space<vmem>>, %arg3: memref<8x512xf32, #tpu.memory_space<vmem>>) attributes {dimension_semantics = [#tpu.dimension_semantics<parallel>], iteration_bounds = array<i64: 1>, scalar_prefetch = 0 : i64, scratch_operands = 0 : i64, tpu.core_type = #tpu.core_type<tc>, window_params = [{pipeline_mode = #tpu.pipeline_mode<synchronous>, transform_indices = @transform_0, window_bounds = array<i64: 1, 128>}, {pipeline_mode = #tpu.pipeline_mode<synchronous>, transform_indices = @transform_1, window_bounds = array<i64: 1, 128>}, {transform_indices = @transform_2, window_bounds = array<i64: 8, 512>}]} {
    %c8_i32 = arith.constant 8 : i32
    %0 = arith.muli %arg0, %c8_i32 : i32
    %1 = tpu.iota {dimensions = array<i32: 0>} : vector<8x1xi32>
    %2 = vector.broadcast %0 : i32 to vector<8x1xi32>
    %3 = arith.addi %1, %2 : vector<8x1xi32>
    %4 = arith.sitofp %3 : vector<8x1xi32> to vector<8x1xf32>
    %c0 = arith.constant 0 : index
    %c0_0 = arith.constant 0 : index
    %5 = vector.load %arg1[%c0, %c0_0] : memref<1x128xf32, #tpu.memory_space<vmem>>, vector<1x128xf32>
    %6 = vector.broadcast %4 : vector<8x1xf32> to vector<8x128xf32>
    %7 = vector.broadcast %5 : vector<1x128xf32> to vector<8x128xf32>
    %8 = arith.mulf %6, %7 : vector<8x128xf32>
    %c0_1 = arith.constant 0 : index
    %c0_2 = arith.constant 0 : index
    %9 = vector.load %arg2[%c0_1, %c0_2] : memref<1x128xf32, #tpu.memory_space<vmem>>, vector<1x128xf32>
    %cst = arith.constant 5.000000e-01 : f32
    %10 = vector.broadcast %cst : f32 to vector<1x128xf32>
    %11 = arith.cmpf ogt, %9, %10 : vector<1x128xf32>
    %12 = math.cos %8 : vector<8x128xf32>
    %13 = math.sin %8 : vector<8x128xf32>
    %14 = vector.shape_cast %11 : vector<1x128xi1> to vector<1x128xi1>
    %15 = vector.broadcast %14 : vector<1x128xi1> to vector<8x128xi1>
    %16 = arith.select %15, %12, %13 : vector<8x128xi1>, vector<8x128xf32>
    %17 = tpu.concatenate %16, %16, %16, %16 in 1 : vector<8x128xf32>, vector<8x128xf32>, vector<8x128xf32>, vector<8x128xf32> -> vector<8x512xf32>
    %c0_3 = arith.constant 0 : index
    %c0_4 = arith.constant 0 : index
    %18 = vector.load %arg3[%c0_3, %c0_4] : memref<8x512xf32, #tpu.memory_space<vmem>>, vector<8x512xf32>
    tpu.vector_store %arg3[%c0_3, %c0_4], %17 {strides = array<i32>} : memref<8x512xf32, #tpu.memory_space<vmem>>, vector<8x512xf32>,
    return
  }
  func.func @transform_0(%arg0: i32) -> (i32, i32) {
    %c0_i32 = arith.constant 0 : i32
    %c0_i32_0 = arith.constant 0 : i32
    %c0_i32_1 = arith.constant 0 : i32
    return %c0_i32, %c0_i32_0 : i32, i32
  }
  func.func @transform_1(%arg0: i32) -> (i32, i32) {
    %c0_i32 = arith.constant 0 : i32
    %c0_i32_0 = arith.constant 0 : i32
    %c0_i32_1 = arith.constant 0 : i32
    return %c0_i32, %c0_i32_0 : i32, i32
  }
  func.func @transform_2(%arg0: i32) -> (i32, i32) {
    %c0_i32 = arith.constant 0 : i32
    %c0_i32_0 = arith.constant 0 : i32
    return %arg0, %c0_i32 : i32, i32
  }
}

</mosaic_0001>

<llo_original>
// kernel: tpu_custom_call.1
$region0: #{tpu_custom_call.1}
  #allocation0 [shape = 'u32[]', space=smem, size = 0x4, offset = 0x4, fixed_abs, tag = 'smem constant byte address 0x4 - core index']
  #allocation1 [shape = 'u32[72,128]{1,0:T(1,128)}', space=vmem, size = 0x9000, scoped, tag = 'internal scratch']
  %s0 = inlined_call_operand.hbm [shape: f32[1,128], index: 0, kind: input, shape index: {}]
  %s1 = inlined_call_operand.hbm [shape: f32[1,128], index: 1, kind: input, shape index: {}]
  %s2 = inlined_call_operand.hbm [shape: f32[8,512], index: 2, kind: output, shape index: {}]
  %s3 = sld [smem:[#allocation0]]
  $region26: #{tpu_custom_call.1} parent=0
    _
  %s5 = ssub.s32 1, %s3
  %s6 = scalar_select 0, %s5, %s3
  $region1: #{tpu_custom_call.1} parent=0
    #allocation2 [shape = 'u8[512]{0}', space=vmem, size = 0x400, scoped, tag = 'input window, operand 0, single buffered']
    #allocation3 [shape = 's32[1]{0}', space=sflag, size = 0x4, scoped, tag = 'scoped memory for tpu_custom_call.1']
    #allocation4 [shape = 's32[1]{0}', space=sflag, size = 0x4, scoped, tag = 'scoped memory for tpu_custom_call.1']
    #allocation5 [shape = 'u8[512]{0}', space=vmem, size = 0x400, scoped, tag = 'input window, operand 1, single buffered']
    #allocation6 [shape = 's32[1]{0}', space=sflag, size = 0x4, scoped, tag = 'scoped memory for tpu_custom_call.1']
    #allocation7 [shape = 'u8[16384]{0}', space=vmem, size = 0x4000, scoped, tag = 'output window, operand 0, single buffered']
    %7 = vsyncpa [#allocation3], 0
    %8 = vsyncpa [#allocation6], 0
    %9 = vsyncpa [#allocation4], 0
    // Predicated region
    $region2: #{tpu_custom_call.1} parent=1 // pred_check
      _
    $region3: #{tpu_custom_call.1} parent=1 // pred_check_branch
      %11 = sbr.rel (0) target = $region5
    $region4: #{tpu_custom_call.1} parent=1 // pred_region
      %13 = vsyncadd [#allocation3], 0
      %s15 = sshll.u32 %s0, 4
      %s16 = int_to_ptr.hbm [resolvable:$true] %s15
      %s17 = sshll.u32 [#allocation2], 4
      %s18 = int_to_ptr.vmem [resolvable:$true] %s17
      %20 = dma.hbm_to_vmem [thread:$0]  %s16, 16, %s18, [#allocation3]
    $region5: #{tpu_custom_call.1} parent=1 // pred_fallthru
      _
    // Predicated region
    $region6: #{tpu_custom_call.1} parent=1 // pred_check
      _
    $region7: #{tpu_custom_call.1} parent=1 // pred_check_branch
      %22 = sbr.rel (0) target = $region9
    $region8: #{tpu_custom_call.1} parent=1 // pred_region
      %24 = vsyncadd [#allocation6], 0
      %s26 = sshll.u32 %s1, 4
      %s27 = int_to_ptr.hbm [resolvable:$true] %s26
      %s28 = sshll.u32 [#allocation5], 4
      %s29 = int_to_ptr.vmem [resolvable:$true] %s28
      %31 = dma.hbm_to_vmem [thread:$0]  %s27, 16, %s29, [#allocation6]
    $region9: #{tpu_custom_call.1} parent=1 // pred_fallthru
      _
    // Predicated region
    $region10: #{tpu_custom_call.1} parent=1 // pred_check
      _
    $region11: #{tpu_custom_call.1} parent=1 // pred_check_branch
      %33 = sbr.rel (0) target = $region13
    $region12: #{tpu_custom_call.1} parent=1 // pred_region
      %35 = dma.done [#allocation3], 16
    $region13: #{tpu_custom_call.1} parent=1 // pred_fallthru
      _
    // Predicated region
    $region14: #{tpu_custom_call.1} parent=1 // pred_check
      _
    $region15: #{tpu_custom_call.1} parent=1 // pred_check_branch
      %37 = sbr.rel (0) target = $region17
    $region16: #{tpu_custom_call.1} parent=1 // pred_region
      %39 = dma.done [#allocation6], 16
    $region17: #{tpu_custom_call.1} parent=1 // pred_fallthru
      _
    %s40 = smul.u32 0, 8
    %v41 = vlaneseq
    %v42 = vshrl.u32 %v41, 7
    %v43 = vstv %s40
    %v44 = vadd.s32 %v42, %v43
    %v45 = vcvt.s32.f32 %v44
    %v46 = vld [vmem:[#allocation2] sm:$0x1]
    %v48 = vperm.slane %v46, 0
    %v50 = vmul.f32 %v45, %v48
    %v51 = vld [vmem:[#allocation5] sm:$0x1]
    %vm52 = vcmp.gt.f32.partialorder %v51, 0.5
    %v53 = vand.u32 2147483647, %v50
    %vm54 = vcmp.le.f32.partialorder %v53, 0.7853982
    %vm55 = vcmp.lt.s32.totalorder %v50, 0
    %v56 = vand.u32 %v50, 2139095040
    %v57 = vshrl.u32 %v56, 23
    %v58 = vsub.s32 %v57, 127
    %v59 = vand.u32 2147483647, %v50
    %v60 = vand.u32 %v59, 8388607
    %v61 = vor.u32 %v60, 8388608
    %v62 = vsub.s32 0, %v61
    %v63 = vadd.s32 %v58, 1
    %vm64 = vcmp.gt.s32.totalorder %v63, 0
    %v65 = vsel %vm64, %v63, 0
    %v66 = vshrl.u32 %v65, 5
    %v67 = vand.u32 %v65, 31
    %v68 = vsub.s32 32, %v67
    %v69 = vshrl.u32 683565275, %v68
    %v70 = vshll.u32 683565275, %v67
    %v71 = vshrl.u32 2475754826, %v68
    %v72 = vor.u32 %v70, %v71
    %v73 = vshll.u32 2475754826, %v67
    %v74 = vshrl.u32 2131351028, %v68
    %v75 = vor.u32 %v73, %v74
    %v76 = vshll.u32 2131351028, %v67
    %v77 = vshrl.u32 2102212464, %v68
    %v78 = vor.u32 %v76, %v77
    %v79 = vshll.u32 2102212464, %v67
    %v80 = vshrl.u32 920167782, %v68
    %v81 = vor.u32 %v79, %v80
    %v82 = vshll.u32 920167782, %v67
    %v83 = vshrl.u32 1326507024, %v68
    %v84 = vor.u32 %v82, %v83
    %vm85 = vcmp.lt.s32.totalorder %v66, 1
    %vm86 = vcmp.lt.s32.totalorder %v66, 2
    %vm87 = vcmp.lt.s32.totalorder %v66, 3
    %vm88 = vcmp.lt.s32.totalorder %v66, 4
    %v89 = vsel %vm85, %v69, %v72
    %v90 = vsel %vm88, %v78, 2102212464
    %v91 = vsel %vm87, %v75, %v90
    %v92 = vsel %vm86, %v89, %v91
    %v93 = vsel %vm85, %v72, %v75
    %v94 = vsel %vm88, %v81, 920167782
    %v95 = vsel %vm87, %v78, %v94
    %v96 = vsel %vm86, %v93, %v95
    %v97 = vsel %vm85, %v75, %v78
    %v98 = vsel %vm88, %v84, 1326507024
    %v99 = vsel %vm87, %v81, %v98
    %v100 = vsel %vm86, %v97, %v99
    %v101 = vshll.u32 %v61, 8
    %v102 = vand.u32 %v101, 65535
    %v103 = vshrl.u32 %v101, 16
    %v104 = vand.u32 %v100, 65535
    %v105 = vshrl.u32 %v100, 16
    %v106 = vmul.u32 %v102, %v104
    %v107 = vmul.u32 %v102, %v105
    %v108 = vmul.u32 %v103, %v104
    %v109 = vmul.u32 %v103, %v105
    %v110 = vshll.u32 %v107, 16
    %v111 = vshrl.u32 %v107, 16
    %v112 = vshll.u32 %v108, 16
    %v113 = vshrl.u32 %v108, 16
    %vm114 = vc.u32 %v106, %v110
    %v115 = vsel %vm114, 1, 0
    %v116 = vadd.s32 %v106, %v110
    %v117 = vadd.s32 %v109, %v115
    %vm118 = vc.u32 %v116, %v112
    %v119 = vsel %vm118, 1, 0
    %v120 = vadd.s32 %v116, %v112
    %v121 = vadd.s32 %v117, %v119
    %v122 = vadd.s32 %v121, %v111
    %v123 = vadd.s32 %v122, %v113
    %v124 = vand.u32 %v101, 65535
    %v125 = vshrl.u32 %v101, 16
    %v126 = vand.u32 %v96, 65535
    %v127 = vshrl.u32 %v96, 16
    %v128 = vmul.u32 %v124, %v126
    %v129 = vmul.u32 %v124, %v127
    %v130 = vmul.u32 %v125, %v126
    %v131 = vmul.u32 %v125, %v127
    %v132 = vshll.u32 %v129, 16
    %v133 = vshrl.u32 %v129, 16
    %v134 = vshll.u32 %v130, 16
    %v135 = vshrl.u32 %v130, 16
    %vm136 = vc.u32 %v128, %v132
    %v137 = vsel %vm136, 1, 0
    %v138 = vadd.s32 %v128, %v132
    %v139 = vadd.s32 %v131, %v137
    %vm140 = vc.u32 %v138, %v134
    %v141 = vsel %vm140, 1, 0
    %v142 = vadd.s32 %v138, %v134
    %v143 = vadd.s32 %v139, %v141
    %v144 = vadd.s32 %v143, %v133
    %v145 = vadd.s32 %v144, %v135
    %v146 = vmul.u32 %v101, %v92
    %v147 = vadd.s32 %v123, %v142
    %vm148 = vc.u32 %v123, %v142
    %v149 = vadd.s32 %v145, 1
    %v150 = vsel %vm148, %v149, %v145
    %v151 = vadd.s32 %v146, %v150
    %v152 = vadd.s32 %v151, 536870912
    %v153 = vshrl.u32 %v152, 30
    %v154 = vshll.u32 %v153, 30
    %v155 = vsub.s32 %v151, %v154
    %vm156 = vcmp.lt.s32.totalorder %v155, 0
    %v157 = vsub.s32 0, %v155
    %v158 = vsel %vm156, %v157, %v155
    %v159 = vclz %v158
    %v160 = vsub.s32 %v159, 2
    %vm161 = vcmp.gt.s32.totalorder 0, %v160
    %v162 = vsel %vm161, 0, %v160
    %v163 = vsub.s32 32, %v162
    %v164 = vshll.u32 %v155, %v162
    %v165 = vshrl.u32 %v147, %v163
    %v166 = vor.u32 %v164, %v165
    %v167 = vsub.s32 4294967266, %v162
    %v168 = vadd.s32 %v167, 127
    %v169 = vshll.u32 %v168, 23
    %v170 = vor.u32 4788187, %v169
    %v171 = vand.u32 2147483647, %v170
    %v173 = vcvt.s32.f32 %v166
    %v174 = vmul.f32 %v173, %v171
    %v175 = vxor.u32 %v174, 2147483648
    %v176 = vsel %vm55, %v175, %v174
    %v177 = vsub.s32 4, %v153
    %v178 = vsel %vm55, %v177, %v153
    %v179 = vsel %vm54, %v50, %v176
    %v180 = vsel %vm54, 0, %v178
    %v181 = vmul.f32 %v179, %v179
    %v182 = vmul.f32 %v181, -0.001358992
    %v183 = vadd.f32 %v182, 0.041655596
    %v184 = vmul.f32 %v181, %v183
    %v185 = vadd.f32 %v184, -0.4999988
    %v186 = vmul.f32 %v181, %v185
    %v187 = vadd.f32 1.0, %v186
    %v188 = vmul.f32 %v179, %v179
    %v189 = vmul.f32 %v188, -0.00019511016
    %v190 = vadd.f32 %v189, 0.008332121
    %v191 = vmul.f32 %v188, %v190
    %v192 = vadd.f32 %v191, -0.16666654
    %v193 = vmul.f32 %v188, %v192
    %v194 = vadd.f32 %v193, 1.0
    %v195 = vmul.f32 %v194, %v179
    %vm196 = vweird.f32 %v50
    %v197 = vand.u32 %v180, 3
    %vm198 = vcmp.lt.s32.totalorder %v197, 2
    %vm199 = vcmp.eq.s32.totalorder %v197, 0
    %v200 = vxor.u32 %v195, 2147483648
    %v201 = vsel %vm199, %v187, %v200
    %vm202 = vcmp.eq.s32.totalorder %v197, 2
    %v203 = vxor.u32 %v187, 2147483648
    %v204 = vsel %vm202, %v203, %v195
    %v205 = vsel %vm198, %v201, %v204
    %v206 = vsel %vm196, nan, %v205
    %v207 = vand.u32 2147483647, %v50
    %vm208 = vcmp.le.f32.partialorder %v207, 0.7853982
    %vm209 = vcmp.lt.s32.totalorder %v50, 0
    %v210 = vand.u32 %v50, 2139095040
    %v211 = vshrl.u32 %v210, 23
    %v212 = vsub.s32 %v211, 127
    %v213 = vand.u32 2147483647, %v50
    %v214 = vand.u32 %v213, 8388607
    %v215 = vor.u32 %v214, 8388608
    %v216 = vsub.s32 0, %v215
    %v217 = vadd.s32 %v212, 1
    %vm218 = vcmp.gt.s32.totalorder %v217, 0
    %v219 = vsel %vm218, %v217, 0
    %v220 = vshrl.u32 %v219, 5
    %v221 = vand.u32 %v219, 31
    %v222 = vsub.s32 32, %v221
    %v223 = vshrl.u32 683565275, %v222
    %v224 = vshll.u32 683565275, %v221
    %v225 = vshrl.u32 2475754826, %v222
    %v226 = vor.u32 %v224, %v225
    %v227 = vshll.u32 2475754826, %v221
    %v228 = vshrl.u32 2131351028, %v222
    %v229 = vor.u32 %v227, %v228
    %v230 = vshll.u32 2131351028, %v221
    %v231 = vshrl.u32 2102212464, %v222
    %v232 = vor.u32 %v230, %v231
    %v233 = vshll.u32 2102212464, %v221
    %v234 = vshrl.u32 920167782, %v222
    %v235 = vor.u32 %v233, %v234
    %v236 = vshll.u32 920167782, %v221
    %v237 = vshrl.u32 1326507024, %v222
    %v238 = vor.u32 %v236, %v237
    %vm239 = vcmp.lt.s32.totalorder %v220, 1
    %vm240 = vcmp.lt.s32.totalorder %v220, 2
    %vm241 = vcmp.lt.s32.totalorder %v220, 3
    %vm242 = vcmp.lt.s32.totalorder %v220, 4
    %v243 = vsel %vm239, %v223, %v226
    %v244 = vsel %vm242, %v232, 2102212464
    %v245 = vsel %vm241, %v229, %v244
    %v246 = vsel %vm240, %v243, %v245
    %v247 = vsel %vm239, %v226, %v229
    %v248 = vsel %vm242, %v235, 920167782
    %v249 = vsel %vm241, %v232, %v248
    %v250 = vsel %vm240, %v247, %v249
    %v251 = vsel %vm239, %v229, %v232
    %v252 = vsel %vm242, %v238, 1326507024
    %v253 = vsel %vm241, %v235, %v252
    %v254 = vsel %vm240, %v251, %v253
    %v255 = vshll.u32 %v215, 8
    %v256 = vand.u32 %v255, 65535
    %v257 = vshrl.u32 %v255, 16
    %v258 = vand.u32 %v254, 65535
    %v259 = vshrl.u32 %v254, 16
    %v260 = vmul.u32 %v256, %v258
    %v261 = vmul.u32 %v256, %v259
    %v262 = vmul.u32 %v257, %v258
    %v263 = vmul.u32 %v257, %v259
    %v264 = vshll.u32 %v261, 16
    %v265 = vshrl.u32 %v261, 16
    %v266 = vshll.u32 %v262, 16
    %v267 = vshrl.u32 %v262, 16
    %vm268 = vc.u32 %v260, %v264
    %v269 = vsel %vm268, 1, 0
    %v270 = vadd.s32 %v260, %v264
    %v271 = vadd.s32 %v263, %v269
    %vm272 = vc.u32 %v270, %v266
    %v273 = vsel %vm272, 1, 0
    %v274 = vadd.s32 %v270, %v266
    %v275 = vadd.s32 %v271, %v273
    %v276 = vadd.s32 %v275, %v265
    %v277 = vadd.s32 %v276, %v267
    %v278 = vand.u32 %v255, 65535
    %v279 = vshrl.u32 %v255, 16
    %v280 = vand.u32 %v250, 65535
    %v281 = vshrl.u32 %v250, 16
    %v282 = vmul.u32 %v278, %v280
    %v283 = vmul.u32 %v278, %v281
    %v284 = vmul.u32 %v279, %v280
    %v285 = vmul.u32 %v279, %v281
    %v286 = vshll.u32 %v283, 16
    %v287 = vshrl.u32 %v283, 16
    %v288 = vshll.u32 %v284, 16
    %v289 = vshrl.u32 %v284, 16
    %vm290 = vc.u32 %v282, %v286
    %v291 = vsel %vm290, 1, 0
    %v292 = vadd.s32 %v282, %v286
    %v293 = vadd.s32 %v285, %v291
    %vm294 = vc.u32 %v292, %v288
    %v295 = vsel %vm294, 1, 0
    %v296 = vadd.s32 %v292, %v288
    %v297 = vadd.s32 %v293, %v295
    %v298 = vadd.s32 %v297, %v287
    %v299 = vadd.s32 %v298, %v289
    %v300 = vmul.u32 %v255, %v246
    %v301 = vadd.s32 %v277, %v296
    %vm302 = vc.u32 %v277, %v296
    %v303 = vadd.s32 %v299, 1
    %v304 = vsel %vm302, %v303, %v299
    %v305 = vadd.s32 %v300, %v304
    %v306 = vadd.s32 %v305, 536870912
    %v307 = vshrl.u32 %v306, 30
    %v308 = vshll.u32 %v307, 30
    %v309 = vsub.s32 %v305, %v308
    %vm310 = vcmp.lt.s32.totalorder %v309, 0
    %v311 = vsub.s32 0, %v309
    %v312 = vsel %vm310, %v311, %v309
    %v313 = vclz %v312
    %v314 = vsub.s32 %v313, 2
    %vm315 = vcmp.gt.s32.totalorder 0, %v314
    %v316 = vsel %vm315, 0, %v314
    %v317 = vsub.s32 32, %v316
    %v318 = vshll.u32 %v309, %v316
    %v319 = vshrl.u32 %v301, %v317
    %v320 = vor.u32 %v318, %v319
    %v321 = vsub.s32 4294967266, %v316
    %v322 = vadd.s32 %v321, 127
    %v323 = vshll.u32 %v322, 23
    %v324 = vor.u32 4788187, %v323
    %v325 = vand.u32 2147483647, %v324
    %v327 = vcvt.s32.f32 %v320
    %v328 = vmul.f32 %v327, %v325
    %v329 = vxor.u32 %v328, 2147483648
    %v330 = vsel %vm209, %v329, %v328
    %v331 = vsub.s32 4, %v307
    %v332 = vsel %vm209, %v331, %v307
    %v333 = vsel %vm208, %v50, %v330
    %v334 = vsel %vm208, 0, %v332
    %v335 = vmul.f32 %v333, %v333
    %v336 = vmul.f32 %v335, -0.001358992
    %v337 = vadd.f32 %v336, 0.041655596
    %v338 = vmul.f32 %v335, %v337
    %v339 = vadd.f32 %v338, -0.4999988
    %v340 = vmul.f32 %v335, %v339
    %v341 = vadd.f32 1.0, %v340
    %v342 = vmul.f32 %v333, %v333
    %v343 = vmul.f32 %v342, -0.00019511016
    %v344 = vadd.f32 %v343, 0.008332121
    %v345 = vmul.f32 %v342, %v344
    %v346 = vadd.f32 %v345, -0.16666654
    %v347 = vmul.f32 %v342, %v346
    %v348 = vadd.f32 %v347, 1.0
    %v349 = vmul.f32 %v348, %v333
    %vm350 = vweird.f32 %v50
    %v351 = vadd.s32 %v334, 3
    %v352 = vand.u32 %v351, 3
    %vm353 = vcmp.lt.s32.totalorder %v352, 2
    %vm354 = vcmp.eq.s32.totalorder %v352, 0
    %v355 = vxor.u32 %v349, 2147483648
    %v356 = vsel %vm354, %v341, %v355
    %vm357 = vcmp.eq.s32.totalorder %v352, 2
    %v358 = vxor.u32 %v341, 2147483648
    %v359 = vsel %vm357, %v358, %v349
    %v360 = vsel %vm353, %v356, %v359
    %v361 = vsel %vm350, nan, %v360
    %v362 = vsel %vm52, 1, 0
    %v363 = vperm.slane %v362, 0
    %vm364 = vcmp.eq.s32.totalorder %v363, 1
    %v365 = vsel %vm364, %v206, %v361
    %366 = vst [vmem:[#allocation7] sm:$0xff] %v365
    %367 = vst [vmem:[#allocation7 + $0x8] sm:$0xff] %v365
    %368 = vst [vmem:[#allocation7 + $0x10] sm:$0xff] %v365
    %369 = vst [vmem:[#allocation7 + $0x18] sm:$0xff] %v365
    // Predicated region
    $region18: #{tpu_custom_call.1} parent=1 // pred_check
      _
    $region19: #{tpu_custom_call.1} parent=1 // pred_check_branch
      %371 = sbr.rel (0) target = $region21
    $region20: #{tpu_custom_call.1} parent=1 // pred_region
      %373 = vsyncadd [#allocation4], 0
      %s375 = sshll.u32 [#allocation7], 4
      %s376 = int_to_ptr.vmem [resolvable:$true] %s375
      %s377 = sshll.u32 %s2, 4
      %s378 = int_to_ptr.hbm [resolvable:$true] %s377
      %380 = dma.vmem_to_hbm [thread:$0]  %s376, 512, %s378, [#allocation4]
    $region21: #{tpu_custom_call.1} parent=1 // pred_fallthru
      _
    // Predicated region
    $region22: #{tpu_custom_call.1} parent=1 // pred_check
      _
    $region23: #{tpu_custom_call.1} parent=1 // pred_check_branch
      %382 = sbr.rel (0) target = $region25
    $region24: #{tpu_custom_call.1} parent=1 // pred_region
      %384 = dma.done [#allocation4], 512
    $region25: #{tpu_custom_call.1} parent=1 // pred_fallthru
      _
    %385 = vsyncpa [#allocation3], 1
    %386 = vsyncpa [#allocation6], 1
    %387 = vsyncpa [#allocation4], 1

</llo_original>
